<compile_context>
chip_gen: v5e
topology: v5e:2x2
jax: 0.10.0
libtpu: 0.0.40
codegen_flags: <defaults>
</compile_context>

<pallas_src>
import functools

import jax
import jax.numpy as jnp
from jax.experimental import pallas as pl
from jax.experimental.pallas import tpu as pltpu


def _estimator_gaze_kernel(is_attention,
                           x_ref, watt_ref, batt_ref,
                           wh_ref, bh_ref,
                           out_ref):
    # x block: (Bt, C, HW) -- HW on the lane axis, C on sublanes.
    x = x_ref[...].astype(jnp.float32)

    if is_attention:
        # 1x1 conv C->1 as VPU multiply + sublane reduce (not an N=1 MXU matmul).
        att = jnp.sum(x * watt_ref[...], axis=1, keepdims=True) + batt_ref[...]
        att = jnp.maximum(att, 0.0)                       # (Bt, 1, HW)
        x = x * att                                       # broadcast over channels

    # AdaptiveAvgPool2d((1,1)) commuted through conv1 (lane-axis XLU reduce).
    pooled = jnp.mean(x, axis=-1)                         # (Bt, C)

    # Fused yaw|pitch heads with conv1/conv2 folded into a single matrix:
    # one tiny (Bt, C) @ (C, 2*NB) dot.
    out = jnp.dot(pooled, wh_ref[...],
                  preferred_element_type=jnp.float32) + bh_ref[...]
    out_ref[0] = out                                      # (1, Bt, 2*NB) block


def _pick_block_batch(B, C, HW, vmem_budget_bytes=8 << 20):
    """Largest Bt that divides B, fits the streamed x block in a conservative
    VMEM budget (safe even for v7x's smaller VMEM with double-buffering), and
    leaves >=2 grid steps when possible so both v7x TensorCores get work."""
    bytes_per_sample = C * HW * 4
    max_bt = max(1, vmem_budget_bytes // max(1, bytes_per_sample))
    candidates = [bt for bt in range(1, B + 1) if B % bt == 0 and bt <= max_bt]
    if not candidates:
        return 1
    two_step = [bt for bt in candidates if B // bt >= 2]
    return max(two_step) if two_step else max(candidates)


def estimator_gaze_forward(x_nchw, params, *, is_attention=True):
    """x_nchw: (B, C, H, W) float32. Returns (B, num_bins, 2) float32."""
    B, C, H, W = x_nchw.shape
    HW = H * W
    NB = params["w2_yaw"].shape[1]

    # Free reshape (no transpose): keep NCHW ordering, flatten spatial -> lanes.
    x = x_nchw.reshape(B, C, HW).astype(jnp.float32)

    # Fold conv1 -> pool -> conv2 (all linear) into a single (C, NB) matrix per
    # head, then fuse yaw & pitch column-wise so x is streamed exactly once.
    w_yaw = params["w1_yaw"] @ params["w2_yaw"]                              # (C, NB)
    b_yaw = params["b1_yaw"] @ params["w2_yaw"] + params["b2_yaw"]           # (1, NB)
    w_pitch = params["w1_pitch"] @ params["w2_pitch"]                        # (C, NB)
    b_pitch = params["b1_pitch"] @ params["w2_pitch"] + params["b2_pitch"]   # (1, NB)
    w_head = jnp.concatenate([w_yaw, w_pitch], axis=1).astype(jnp.float32)   # (C, 2NB)
    b_head = jnp.concatenate([b_yaw, b_pitch], axis=1).astype(jnp.float32)   # (1, 2NB)

    w_att = params["w_att"].reshape(1, C, 1).astype(jnp.float32)             # (1, C, 1)
    b_att = params["b_att"].reshape(1, 1).astype(jnp.float32)                # (1, 1)

    Bt = _pick_block_batch(B, C, HW)
    n_blocks = B // Bt

    def rep(shape):  # replicated (non-batched) operand: full-array block
        return pl.BlockSpec(shape, lambda i: (0,) * len(shape))

    kernel = functools.partial(_estimator_gaze_kernel, bool(is_attention))

    out = pl.pallas_call(
        kernel,
        out_shape=jax.ShapeDtypeStruct((n_blocks, Bt, 2 * NB), jnp.float32),
        grid_spec=pltpu.PrefetchScalarGridSpec(
            num_scalar_prefetch=0,
            grid=(n_blocks,),
            in_specs=[
                pl.BlockSpec((Bt, C, HW), lambda i: (i, 0, 0)),   # x, streamed
                rep((1, C, 1)), rep((1, 1)),                      # attention conv
                rep((C, 2 * NB)), rep((1, 2 * NB)),               # folded heads
            ],
            out_specs=pl.BlockSpec((1, Bt, 2 * NB), lambda i: (i, 0, 0)),
        ),
        compiler_params=pltpu.CompilerParams(
            dimension_semantics=("parallel",)),
    )(x, w_att, b_att, w_head, b_head)

    out = out.reshape(B, 2 * NB)
    pre_yaw, pre_pitch = out[:, :NB], out[:, NB:]
    # torch.stack((pre_yaw, pre_pitch), dim=2) -> (B, NB, 2)
    return jnp.stack((pre_yaw, pre_pitch), axis=2)


def _reference_forward(x_nchw, params, *, is_attention=True):
    """Pure-JAX reference matching the PyTorch forward (no folding tricks)."""
    B, C, H, W = x_nchw.shape
    x = jnp.transpose(x_nchw, (0, 2, 3, 1)).reshape(B, H * W, C).astype(jnp.float32)
    if is_attention:
        att = jnp.maximum(x @ params["w_att"] + params["b_att"], 0.0)
        x = x * att

    def head(w1, b1, w2, b2):
        h = x @ w1 + b1                       # (B, HW, M)
        return jnp.mean(h, axis=1) @ w2 + b2  # (B, NB)

    yaw = head(params["w1_yaw"], params["b1_yaw"], params["w2_yaw"], params["b2_yaw"])
    pitch = head(params["w1_pitch"], params["b1_pitch"], params["w2_pitch"], params["b2_pitch"])
    return jnp.stack((yaw, pitch), axis=2)


def init_params(key, input_channel, num_bins, num_middle):
    """Deterministic synthetic weights matching the PyTorch module's shapes.

    PyTorch conv weights are (out, in, 1, 1); stored pre-transposed as (in, out)
    matrices so 1x1 conv == right-matmul. Biases stored as (1, out).
    """
    ks = jax.random.split(key, 10)
    s = 0.05

    def mat(k, shape):
        return s * jax.random.normal(k, shape, dtype=jnp.float32)

    return {
        # attention conv: Conv2d(C, 1, 1)
        "w_att": mat(ks[0], (input_channel, 1)),
        "b_att": mat(ks[1], (1, 1)),
        # fc_yaw: conv1 (C->M), conv2 (M->NB)
        "w1_yaw": mat(ks[2], (input_channel, num_middle)),
        "b1_yaw": mat(ks[3], (1, num_middle)),
        "w2_yaw": mat(ks[4], (num_middle, num_bins)),
        "b2_yaw": mat(ks[5], (1, num_bins)),
        # fc_pitch: conv1 (C->M), conv2 (M->NB)
        "w1_pitch": mat(ks[6], (input_channel, num_middle)),
        "b1_pitch": mat(ks[7], (1, num_middle)),
        "w2_pitch": mat(ks[8], (num_middle, num_bins)),
        "b2_pitch": mat(ks[9], (1, num_bins)),
    }


if __name__ == "__main__":
    # Small shapes consistent with the module:
    #   opt.head_conv=8, opt.num_bins_g=16, opt.num_middle_gaze=32,
    #   opt.is_attation_gaze=True
    B, C, H, W = 4, 8, 8, 8
    NUM_BINS, NUM_MIDDLE = 16, 32

    key = jax.random.PRNGKey(0)
    k_x, k_p = jax.random.split(key)
    x = jax.random.normal(k_x, (B, C, H, W), dtype=jnp.float32)
    params = init_params(k_p, C, NUM_BINS, NUM_MIDDLE)

    out = estimator_gaze_forward(x, params, is_attention=True)
    out = jax.block_until_ready(out)
    assert out.shape == (B, NUM_BINS, 2), out.shape

    # Correctness vs. the un-refactored reference (pool/weight folding changes
    # fp32 summation order only, so differences are ~1e-6 level).
    ref = _reference_forward(x, params, is_attention=True)
    max_err = float(jnp.max(jnp.abs(out - ref)))
    assert jnp.allclose(out, ref, rtol=1e-3, atol=1e-4), max_err

    print("KERNEL_OK")
</pallas_src>

<mosaic_0001>
module attributes {stable_mosaic.version = 11 : i64} {
  func.func @_estimator_gaze_kernel(%arg0: i32, %arg1: memref<2x8x64xf32, #tpu.memory_space<vmem>>, %arg2: memref<1x8x1xf32, #tpu.memory_space<vmem>>, %arg3: memref<1x1xf32, #tpu.memory_space<vmem>>, %arg4: memref<8x32xf32, #tpu.memory_space<vmem>>, %arg5: memref<1x32xf32, #tpu.memory_space<vmem>>, %arg6: memref<1x2x32xf32, #tpu.memory_space<vmem>>) attributes {dimension_semantics = [#tpu.dimension_semantics<parallel>], iteration_bounds = array<i64: 2>, scalar_prefetch = 0 : i64, scratch_operands = 0 : i64, tpu.core_type = #tpu.core_type<tc>, window_params = [{transform_indices = @transform_0, window_bounds = array<i64: 2, 8, 64>}, {pipeline_mode = #tpu.pipeline_mode<synchronous>, transform_indices = @transform_1, window_bounds = array<i64: 1, 8, 1>}, {pipeline_mode = #tpu.pipeline_mode<synchronous>, transform_indices = @transform_2, window_bounds = array<i64: 1, 1>}, {pipeline_mode = #tpu.pipeline_mode<synchronous>, transform_indices = @transform_3, window_bounds = array<i64: 8, 32>}, {pipeline_mode = #tpu.pipeline_mode<synchronous>, transform_indices = @transform_4, window_bounds = array<i64: 1, 32>}, {transform_indices = @transform_5, window_bounds = array<i64: 1, 2, 32>}]} {
    %c0 = arith.constant 0 : index
    %c0_0 = arith.constant 0 : index
    %c0_1 = arith.constant 0 : index
    %0 = vector.load %arg1[%c0, %c0_0, %c0_1] : memref<2x8x64xf32, #tpu.memory_space<vmem>>, vector<2x8x64xf32>
    %c0_2 = arith.constant 0 : index
    %c0_3 = arith.constant 0 : index
    %c0_4 = arith.constant 0 : index
    %1 = vector.load %arg2[%c0_2, %c0_3, %c0_4] : memref<1x8x1xf32, #tpu.memory_space<vmem>>, vector<1x8x1xf32>
    %2 = vector.broadcast %1 : vector<1x8x1xf32> to vector<2x8x64xf32>
    %3 = arith.mulf %0, %2 : vector<2x8x64xf32>
    %cst = arith.constant dense<0.000000e+00> : vector<2x64xf32>
    %4 = vector.multi_reduction <add>, %3, %cst [1] : vector<2x8x64xf32> to vector<2x64xf32>
    %5 = vector.shape_cast %4 : vector<2x64xf32> to vector<2x1x64xf32>
    %c0_5 = arith.constant 0 : index
    %c0_6 = arith.constant 0 : index
    %6 = vector.load %arg3[%c0_5, %c0_6] : memref<1x1xf32, #tpu.memory_space<vmem>>, vector<1x1xf32>
    %7 = vector.shape_cast %6 : vector<1x1xf32> to vector<1x1x1xf32>
    %8 = vector.broadcast %7 : vector<1x1x1xf32> to vector<2x1x64xf32>
    %9 = arith.addf %5, %8 : vector<2x1x64xf32>
    %cst_7 = arith.constant 0.000000e+00 : f32
    %10 = vector.broadcast %cst_7 : f32 to vector<2x1x64xf32>
    %11 = arith.maximumf %9, %10 : vector<2x1x64xf32>
    %12 = vector.broadcast %11 : vector<2x1x64xf32> to vector<2x8x64xf32>
    %13 = arith.mulf %0, %12 : vector<2x8x64xf32>
    %cst_8 = arith.constant dense<0.000000e+00> : vector<2x8xf32>
    %14 = vector.multi_reduction <add>, %13, %cst_8 [2] : vector<2x8x64xf32> to vector<2x8xf32>
    %cst_9 = arith.constant 6.400000e+01 : f32
    %15 = vector.broadcast %cst_9 : f32 to vector<2x8xf32>
    %16 = arith.divf %14, %15 : vector<2x8xf32>
    %c0_10 = arith.constant 0 : index
    %c0_11 = arith.constant 0 : index
    %17 = vector.load %arg4[%c0_10, %c0_11] : memref<8x32xf32, #tpu.memory_space<vmem>>, vector<8x32xf32>
    %cst_12 = arith.constant dense<0.000000e+00> : vector<2x32xf32>
    %18 = tpu.matmul %16, %17, %cst_12 {dimension_numbers = #tpu.dot_dimension_numbers<[1], [0], [0], [1], [0, 0, 1, 1], [], []>} : vector<2x8xf32>, vector<8x32xf32>, vector<2x32xf32> -> vector<2x32xf32>
    %c0_13 = arith.constant 0 : index
    %c0_14 = arith.constant 0 : index
    %19 = vector.load %arg5[%c0_13, %c0_14] : memref<1x32xf32, #tpu.memory_space<vmem>>, vector<1x32xf32>
    %20 = vector.broadcast %19 : vector<1x32xf32> to vector<2x32xf32>
    %21 = arith.addf %18, %20 : vector<2x32xf32>
    %c0_15 = arith.constant 0 : index
    %c0_16 = arith.constant 0 : index
    %c0_17 = arith.constant 0 : index
    %22 = vector.load %arg6[%c0_15, %c0_16, %c0_17] : memref<1x2x32xf32, #tpu.memory_space<vmem>>, vector<1x2x32xf32>
    %23 = vector.shape_cast %22 : vector<1x2x32xf32> to vector<2x32xf32>
    %24 = vector.shape_cast %21 : vector<2x32xf32> to vector<1x2x32xf32>
    tpu.vector_store %arg6[%c0_15, %c0_16, %c0_17], %24 {strides = array<i32>} : memref<1x2x32xf32, #tpu.memory_space<vmem>>, vector<1x2x32xf32>,
    return
  }
  func.func @transform_0(%arg0: i32) -> (i32, i32, i32) {
    %c0_i32 = arith.constant 0 : i32
    %c0_i32_0 = arith.constant 0 : i32
    %c0_i32_1 = arith.constant 0 : i32
    return %arg0, %c0_i32, %c0_i32_0 : i32, i32, i32
  }
  func.func @transform_1(%arg0: i32) -> (i32, i32, i32) {
    %c0_i32 = arith.constant 0 : i32
    %c0_i32_0 = arith.constant 0 : i32
    %c0_i32_1 = arith.constant 0 : i32
    %c0_i32_2 = arith.constant 0 : i32
    return %c0_i32, %c0_i32_0, %c0_i32_1 : i32, i32, i32
  }
  func.func @transform_2(%arg0: i32) -> (i32, i32) {
    %c0_i32 = arith.constant 0 : i32
    %c0_i32_0 = arith.constant 0 : i32
    %c0_i32_1 = arith.constant 0 : i32
    return %c0_i32, %c0_i32_0 : i32, i32
  }
  func.func @transform_3(%arg0: i32) -> (i32, i32) {
    %c0_i32 = arith.constant 0 : i32
    %c0_i32_0 = arith.constant 0 : i32
    %c0_i32_1 = arith.constant 0 : i32
    return %c0_i32, %c0_i32_0 : i32, i32
  }
  func.func @transform_4(%arg0: i32) -> (i32, i32) {
    %c0_i32 = arith.constant 0 : i32
    %c0_i32_0 = arith.constant 0 : i32
    %c0_i32_1 = arith.constant 0 : i32
    return %c0_i32, %c0_i32_0 : i32, i32
  }
  func.func @transform_5(%arg0: i32) -> (i32, i32, i32) {
    %c0_i32 = arith.constant 0 : i32
    %c0_i32_0 = arith.constant 0 : i32
    %c0_i32_1 = arith.constant 0 : i32
    return %arg0, %c0_i32, %c0_i32_0 : i32, i32, i32
  }
}

</mosaic_0001>

<llo_original>
// kernel: tpu_custom_call.1
$region0: #{tpu_custom_call.1}
  #allocation0 [shape = 'u32[]', space=smem, size = 0x4, offset = 0x4, fixed_abs, tag = 'smem constant byte address 0x4 - core index']
  #allocation1 [shape = 'u32[72,128]{1,0:T(1,128)}', space=vmem, size = 0x9000, scoped, tag = 'internal scratch']
  #allocation2 [shape = 'f32[1,1]{1,0:T(1,128)S(1)}', space=vmem, size = 0x200, scoped, tag = 'scoped memory for tpu_custom_call.1']
  %s0 = inlined_call_operand.hbm [shape: f32[4,8,64], index: 0, kind: input, shape index: {}]
  %s1 = inlined_call_operand.vmem [shape: f32[1,8,1], index: 1, kind: input, shape index: {}]
  %s2 = inlined_call_operand.<no memory space> [shape: f32[1,1], index: 2, kind: input, shape index: {}]
  %s3 = inlined_call_operand.vmem [shape: f32[8,32], index: 3, kind: input, shape index: {}]
  %s4 = inlined_call_operand.vmem [shape: f32[1,32], index: 4, kind: input, shape index: {}]
  %s5 = inlined_call_operand.hbm [shape: f32[2,2,32], index: 5, kind: output, shape index: {}]
  %s6 = sld [smem:[#allocation0]]
  $region57: #{tpu_custom_call.1} parent=0
    _
  %s8 = ssub.s32 1, %s6
  %s9 = scalar_select 0, %s8, %s6
  %v10 = vstv %s2
  %11 = vst [vmem:[#allocation2] sm:$0x1] %v10
  $region1: #{tpu_custom_call.1} parent=0
    #allocation3 [shape = 'u8[16384]{0}', space=vmem, size = 0x4000, scoped, tag = 'input window, operand 0']
    #allocation4 [shape = 's32[2]{0}', space=sflag, size = 0x8, scoped, tag = 'scoped memory for tpu_custom_call.1']
    #allocation5 [shape = 's32[2]{0}', space=sflag, size = 0x8, scoped, tag = 'scoped memory for tpu_custom_call.1']
    #allocation6 [shape = 'u8[2048]{0}', space=vmem, size = 0x800, scoped, tag = 'output window, operand 0']
    %12 = vsyncpa [#allocation4], 0
    %s13 = scalar_lea.sflag [#allocation4], 1
    %14 = vsyncpa %s13, 0
    %15 = vsyncpa [#allocation5], 0
    %s16 = scalar_lea.sflag [#allocation5], 1
    %17 = vsyncpa %s16, 0
    loop: start=0, step=1, limit=4
    $region2: #{tpu_custom_call.1} parent=1 // loop_pre_header
      _
    $region3: #{tpu_custom_call.1} parent=1 // loop_header
      %s19 = sphi 0, %s23
      %p20 = scmp.ge.s32.totalorder %s19, 4
      %s29 = sphi 0, %s31
      %s32 = sphi 0, %s29
      %s33 = sphi 0, %s32
      %s49 = sphi 0, %s33
      %s53 = sphi 0, %s53
      %s55 = sphi 0, %s53
      %s56 = sphi 0, %s55
      %s70 = sphi 0, %s56
      %s74 = sphi 0, %s74
      %s76 = sphi 0, %s74
      %s77 = sphi 0, %s76
      %s91 = sphi 0, %s77
      %s95 = sphi 0, %s95
      %s97 = sphi 0, %s95
      %s98 = sphi 0, %s97
      %s112 = sphi 0, %s98
      %s116 = sphi 0, %s116
      %s118 = sphi 0, %s116
      %s119 = sphi 0, %s118
      %s133 = sphi 0, %s119
      %s139 = sphi 0, %s141
      %s142 = sphi 0, %s139
      %s143 = sphi 0, %s142
      %s159 = sphi 0, %s143
    $region4: #{tpu_custom_call.1} parent=1 // loop_header_branch
      %22 = sbr.rel (%p20) target = $region8
    $region5: #{tpu_custom_call.1} parent=1 // loop_body
      %s24 = ssub.s32 %s19, 1
      %s25 = ssub.s32 %s19, 2
      %s26 = sadd.s32 %s19, 1
      %s27 = ssub.s32 %s19, %s26
      %p28 = scmp.eq.s32.totalorder %s27, 0
      %s30 = sadd.s32 %s29, 1
      %s31 = scalar_select %p28, %s29, %s30
      %p34 = pneg %p28
      %p35 = scmp.eq.s32.totalorder %s19, 1
      %p36 = por %p34, %p35
      %p37 = scmp.ne.s32.totalorder %s29, %s32
      %p38 = scmp.eq.s32.totalorder %s19, 0
      %p39 = por %p37, %p38
      %p40 = scmp.ne.s32.totalorder %s29, %s32
      %p41 = scmp.eq.s32.totalorder %s24, 1
      %p42 = por %p40, %p41
      %p43 = scmp.ne.s32.totalorder %s32, %s33
      %p44 = scmp.eq.s32.totalorder %s24, 0
      %p45 = por %p43, %p44
      %p46 = scmp.ne.s32.totalorder %s32, %s33
      %p47 = scmp.eq.s32.totalorder %s25, 1
      %p48 = por %p46, %p47
      %p50 = scmp.ne.s32.totalorder %s33, %s49
      %p51 = scmp.eq.s32.totalorder %s25, 0
      %p52 = por %p50, %p51
      %s54 = sadd.s32 %s53, 1
      %p57 = scmp.eq.s32.totalorder %s19, 1
      %p58 = scmp.ne.s32.totalorder %s53, %s55
      %p59 = scmp.eq.s32.totalorder %s19, 0
      %p60 = por %p58, %p59
      %p61 = scmp.ne.s32.totalorder %s53, %s55
      %p62 = scmp.eq.s32.totalorder %s24, 1
      %p63 = por %p61, %p62
      %p64 = scmp.ne.s32.totalorder %s55, %s56
      %p65 = scmp.eq.s32.totalorder %s24, 0
      %p66 = por %p64, %p65
      %p67 = scmp.ne.s32.totalorder %s55, %s56
      %p68 = scmp.eq.s32.totalorder %s25, 1
      %p69 = por %p67, %p68
      %p71 = scmp.ne.s32.totalorder %s56, %s70
      %p72 = scmp.eq.s32.totalorder %s25, 0
      %p73 = por %p71, %p72
      %s75 = sadd.s32 %s74, 1
      %p78 = scmp.eq.s32.totalorder %s19, 1
      %p79 = scmp.ne.s32.totalorder %s74, %s76
      %p80 = scmp.eq.s32.totalorder %s19, 0
      %p81 = por %p79, %p80
      %p82 = scmp.ne.s32.totalorder %s74, %s76
      %p83 = scmp.eq.s32.totalorder %s24, 1
      %p84 = por %p82, %p83
      %p85 = scmp.ne.s32.totalorder %s76, %s77
      %p86 = scmp.eq.s32.totalorder %s24, 0
      %p87 = por %p85, %p86
      %p88 = scmp.ne.s32.totalorder %s76, %s77
      %p89 = scmp.eq.s32.totalorder %s25, 1
      %p90 = por %p88, %p89
      %p92 = scmp.ne.s32.totalorder %s77, %s91
      %p93 = scmp.eq.s32.totalorder %s25, 0
      %p94 = por %p92, %p93
      %s96 = sadd.s32 %s95, 1
      %p99 = scmp.eq.s32.totalorder %s19, 1
      %p100 = scmp.ne.s32.totalorder %s95, %s97
      %p101 = scmp.eq.s32.totalorder %s19, 0
      %p102 = por %p100, %p101
      %p103 = scmp.ne.s32.totalorder %s95, %s97
      %p104 = scmp.eq.s32.totalorder %s24, 1
      %p105 = por %p103, %p104
      %p106 = scmp.ne.s32.totalorder %s97, %s98
      %p107 = scmp.eq.s32.totalorder %s24, 0
      %p108 = por %p106, %p107
      %p109 = scmp.ne.s32.totalorder %s97, %s98
      %p110 = scmp.eq.s32.totalorder %s25, 1
      %p111 = por %p109, %p110
      %p113 = scmp.ne.s32.totalorder %s98, %s112
      %p114 = scmp.eq.s32.totalorder %s25, 0
      %p115 = por %p113, %p114
      %s117 = sadd.s32 %s116, 1
      %p120 = scmp.eq.s32.totalorder %s19, 1
      %p121 = scmp.ne.s32.totalorder %s116, %s118
      %p122 = scmp.eq.s32.totalorder %s19, 0
      %p123 = por %p121, %p122
      %p124 = scmp.ne.s32.totalorder %s116, %s118
      %p125 = scmp.eq.s32.totalorder %s24, 1
      %p126 = por %p124, %p125
      %p127 = scmp.ne.s32.totalorder %s118, %s119
      %p128 = scmp.eq.s32.totalorder %s24, 0
      %p129 = por %p127, %p128
      %p130 = scmp.ne.s32.totalorder %s118, %s119
      %p131 = scmp.eq.s32.totalorder %s25, 1
      %p132 = por %p130, %p131
      %p134 = scmp.ne.s32.totalorder %s119, %s133
      %p135 = scmp.eq.s32.totalorder %s25, 0
      %p136 = por %p134, %p135
      %s137 = ssub.s32 %s19, %s26
      %p138 = scmp.eq.s32.totalorder %s137, 0
      %s140 = sadd.s32 %s139, 1
      %s141 = scalar_select %p138, %s139, %s140
      %p144 = pneg %p138
      %p145 = scmp.eq.s32.totalorder %s19, 1
      %p146 = por %p144, %p145
      %p147 = scmp.ne.s32.totalorder %s139, %s142
      %p148 = scmp.eq.s32.totalorder %s19, 0
      %p149 = por %p147, %p148
      %p150 = scmp.ne.s32.totalorder %s139, %s142
      %p151 = scmp.eq.s32.totalorder %s24, 1
      %p152 = por %p150, %p151
      %p153 = scmp.ne.s32.totalorder %s142, %s143
      %p154 = scmp.eq.s32.totalorder %s24, 0
      %p155 = por %p153, %p154
      %p156 = scmp.ne.s32.totalorder %s142, %s143
      %p157 = scmp.eq.s32.totalorder %s25, 1
      %p158 = por %p156, %p157
      %p160 = scmp.ne.s32.totalorder %s143, %s159
      %p161 = scmp.eq.s32.totalorder %s25, 0
      %p162 = por %p160, %p161
      %p163 = scmp.le.s32.totalorder 1, %s19
      %p164 = scmp.lt.s32.totalorder %s19, 3
      %p165 = pnand %p163, %p164
      %p166 = pneg %p165
      // Predicated region
      $region9: #{tpu_custom_call.1} parent=5 // pred_check
        _
      $region10: #{tpu_custom_call.1} parent=5 // pred_check_branch
        %168 = sbr.rel (%p165) target = $region12
      $region11: #{tpu_custom_call.1} parent=5 // pred_region
        %s169 = ssub.s32 %s19, 1
        // Predicated region
        $region13: #{tpu_custom_call.1} parent=11 // pred_check
          %p170 = pneg %p66
        $region14: #{tpu_custom_call.1} parent=11 // pred_check_branch
          %172 = sbr.rel (%p170) target = $region16
        $region15: #{tpu_custom_call.1} parent=11 // pred_region
          _
        $region16: #{tpu_custom_call.1} parent=11 // pred_fallthru
          _
        // Predicated region
        $region17: #{tpu_custom_call.1} parent=11 // pred_check
          %p173 = pneg %p87
        $region18: #{tpu_custom_call.1} parent=11 // pred_check_branch
          %175 = sbr.rel (%p173) target = $region20
        $region19: #{tpu_custom_call.1} parent=11 // pred_region
          _
        $region20: #{tpu_custom_call.1} parent=11 // pred_fallthru
          _
        // Predicated region
        $region21: #{tpu_custom_call.1} parent=11 // pred_check
          %p176 = pneg %p108
        $region22: #{tpu_custom_call.1} parent=11 // pred_check_branch
          %178 = sbr.rel (%p176) target = $region24
        $region23: #{tpu_custom_call.1} parent=11 // pred_region
          _
        $region24: #{tpu_custom_call.1} parent=11 // pred_fallthru
          _
        // Predicated region
        $region25: #{tpu_custom_call.1} parent=11 // pred_check
          %p179 = pneg %p129
        $region26: #{tpu_custom_call.1} parent=11 // pred_check_branch
          %181 = sbr.rel (%p179) target = $region28
        $region27: #{tpu_custom_call.1} parent=11 // pred_region
          _
        $region28: #{tpu_custom_call.1} parent=11 // pred_fallthru
          _
      $region12: #{tpu_custom_call.1} parent=5 // pred_fallthru
        _
      %p182 = scmp.lt.s32.totalorder %s19, 2
      // Predicated region
      $region29: #{tpu_custom_call.1} parent=5 // pred_check
        %p183 = pneg %p182
      $region30: #{tpu_custom_call.1} parent=5 // pred_check_branch
        %185 = sbr.rel (%p183) target = $region32
      $region31: #{tpu_custom_call.1} parent=5 // pred_region
        // Predicated region
        $region33: #{tpu_custom_call.1} parent=31 // pred_check
          %p186 = pneg %p39
        $region34: #{tpu_custom_call.1} parent=31 // pred_check_branch
          %188 = sbr.rel (%p186) target = $region36
        $region35: #{tpu_custom_call.1} parent=31 // pred_region
          %s189 = sand.u32 %s29, 1
          %s190 = scalar_lea.sflag [#allocation4], %s189
          %s191 = sand.u32 %s29, 1
          %s192 = smul.addr %s191, 16
          %s193 = scalar_lea.vmem [#allocation3], %s192
          %s194 = smul.u32 2, %s19
          %196 = vsyncadd %s190, 0
          %s197 = smul.addr %s194, 8
          %s198 = scalar_lea.hbm %s0, %s197
          %s199 = sshll.u32 %s198, 4
          %s200 = int_to_ptr.hbm [resolvable:$true] %s199
          %s201 = sshll.u32 %s193, 4
          %s202 = int_to_ptr.vmem [resolvable:$true] %s201
          %207 = dma.hbm_to_vmem [thread:$0]  %s200, 256, %s202, %s190, 128, 128, 8
        $region36: #{tpu_custom_call.1} parent=31 // pred_fallthru
          _
      $region32: #{tpu_custom_call.1} parent=5 // pred_fallthru
        _
      %p208 = scmp.le.s32.totalorder 1, %s19
      %p209 = scmp.lt.s32.totalorder %s19, 3
      %p210 = pnand %p208, %p209
      %p211 = pneg %p210
      // Predicated region
      $region37: #{tpu_custom_call.1} parent=5 // pred_check
        _
      $region38: #{tpu_custom_call.1} parent=5 // pred_check_branch
        %213 = sbr.rel (%p210) target = $region40
      $region39: #{tpu_custom_call.1} parent=5 // pred_region
        %s214 = ssub.s32 %s19, 1
        %s215 = sand.u32 %s32, 1
        %s216 = scalar_lea.sflag [#allocation4], %s215
        %s217 = sand.u32 %s32, 1
        %s218 = smul.addr %s217, 16
        %s219 = scalar_lea.vmem [#allocation3], %s218
        // Predicated region
        $region41: #{tpu_custom_call.1} parent=39 // pred_check
          %p220 = pneg %p45
        $region42: #{tpu_custom_call.1} parent=39 // pred_check_branch
          %222 = sbr.rel (%p220) target = $region44
        $region43: #{tpu_custom_call.1} parent=39 // pred_region
          %224 = dma.done %s216, 256
        $region44: #{tpu_custom_call.1} parent=39 // pred_fallthru
          _
        %s225 = sand.u32 %s32, 1
        %s226 = scalar_lea.sflag [#allocation4], %s225
        %s227 = sand.u32 %s32, 1
        %s228 = smul.addr %s227, 16
        %s229 = scalar_lea.vmem [#allocation3], %s228
        %p230 = pneg %p45
        %p231 = pneg %p42
        %p232 = pneg %p66
        %p233 = pneg %p63
        %p234 = pneg %p87
        %p235 = pneg %p84
        %p236 = pneg %p108
        %p237 = pneg %p105
        %p238 = pneg %p129
        %p239 = pneg %p126
        %p240 = pneg %p155
        %p241 = pneg %p152
        %s242 = sand.u32 %s142, 1
        %s243 = scalar_lea.sflag [#allocation5], %s242
        %s244 = sand.u32 %s142, 1
        %s245 = smul.addr %s244, 2
        %s246 = scalar_lea.vmem [#allocation6], %s245
        %s247 = smul.u32 2, %s24
        %v248 = vld [vmem:[%s219] sm:$0xff]
        %v249 = vld [vmem:[%s219 + $0x8] sm:$0xff]
        %v250 = vld [vmem:[%s1] sm:$0xff]
        %252 = vset.pattern.permute.xlu0 0
        %253 = vperm.xlu0 %252, %v250
        %v254 = vpop.permute.xlu0 %253
        %v256 = vmul.f32 %v248, %v254
        %v257 = vmul.f32 %v249, %v254
        %vm258 = vcmask 523264
        %v259 = vsel %vm258, %v256, 0.0
        %v260 = vrot.slane %v259, 4
        %v261 = vadd.f32 %v259, %v260
        %v262 = vrot.slane %v261, 2
        %v263 = vadd.f32 %v261, %v262
        %v264 = vrot.slane %v263, 1
        %v265 = vadd.f32 %v263, %v264
        %v266 = vsel %vm258, %v257, 0.0
        %v267 = vrot.slane %v266, 4
        %v268 = vadd.f32 %v266, %v267
        %v269 = vrot.slane %v268, 2
        %v270 = vadd.f32 %v268, %v269
        %v271 = vrot.slane %v270, 1
        %v272 = vadd.f32 %v270, %v271
        %v273 = vld [vmem:[#allocation2] sm:$0x1]
        %275 = vset.pattern.permute.xlu0 0
        %276 = vperm.xlu0 %275, %v273
        %v277 = vpop.permute.xlu0 %276
        %v279 = vperm.slane %v277, 0
        %v280 = vadd.f32 %v265, %v279
        %v281 = vadd.f32 %v272, %v279
        %v282 = vmax.f32 %v280, 0.0
        %v283 = vmax.f32 %v281, 0.0
        %v284 = vmul.f32 %v248, %v282
        %v285 = vmul.f32 %v249, %v283
        %v286 = vsel %vm258, %v284, 0.0
        %287 = vadd.xlane.f32.xlu0 %v286
        %v288 = vpop.xlane.xlu0 %287
        %v289 = vsel %vm258, %v285, 0.0
        %290 = vadd.xlane.f32.xlu0 %v289
        %v291 = vpop.xlane.xlu0 %290
        %v292 = vrcp.pop 64.0
        %v293 = vmul.f32 64.0, %v292
        %v294 = vsub.f32 1.0, %v293
        %v295 = vmul.f32 %v292, %v294
        %v296 = vadd.f32 %v292, %v295
        %vm297 = vweird.f32 %v292
        %v298 = vsel %vm297, %v292, %v296
        %v299 = vmul.f32 %v288, %v298
        %v300 = vmul.f32 %v291, %v298
        %v301 = vld [vmem:[%s3] sm:$0xff]
        %v302 = vld [vmem:[%s4] sm:$0x1]
        %v304 = vperm.slane %v302, 0
        %v308 = vlaneseq
        %v309 = vand.u32 %v308, 127
        %v310 = vperm.slane %v299, %v309
        %v311 = vperm.slane %v300, %v309
        %vm312 = vcmask 1041409
        %v313 = vsel %vm312, %v311, %v310
        %vm314 = vcmask 64512
        %v315 = vsel %vm314, %v313, 0
        %317 = vmatpush.msra.mxu0 0.0
        %318 = vmatpush.msra.mxu0 0.0
        %319 = vmatpush.msra.mxu0 0.0
        %320 = vmatpush.msra.mxu0 0.0
        %321 = vmatpush.msra.mxu0 0.0
        %322 = vmatpush.msra.mxu0 0.0
        %323 = vmatpush.msra.mxu0 0.0
        %324 = vmatpush.msra.mxu0 0.0
        %325 = vmatpush.msra.mxu0 0.0
        %326 = vmatpush.msra.mxu0 0.0
        %327 = vmatpush.msra.mxu0 0.0
        %328 = vmatpush.msra.mxu0 0.0
        %329 = vmatpush.msra.mxu0 0.0
        %330 = vmatpush.msra.mxu0 0.0
        %331 = vmatpush.msra.mxu0 0.0
        %332 = vmatpush.msra.mxu0 %v301
        %333 = vmatmul.f32.gmra.mxu0 %v315
        %v334 = vpop.f32.mrf.mxu0
        %v335 = vadd.f32 %v304, %v334
        %336 = vdwg.mxu0
        %vm337 = vcmask 254976
        %338 = vst.msk [vmem:[%s246] sm:$0x3] %vm337, %v335
        %s339 = sand.u32 %s142, 1
        %s340 = scalar_lea.sflag [#allocation5], %s339
        %s341 = sand.u32 %s142, 1
        %s342 = smul.addr %s341, 2
        %s343 = scalar_lea.vmem [#allocation6], %s342
        // Predicated region
        $region45: #{tpu_custom_call.1} parent=39 // pred_check
          %p344 = pneg %p152
        $region46: #{tpu_custom_call.1} parent=39 // pred_check_branch
          %346 = sbr.rel (%p344) target = $region48
        $region47: #{tpu_custom_call.1} parent=39 // pred_region
          %348 = vsyncadd %s340, 0
          %s349 = smul.addr %s24, 2
          %s350 = scalar_lea.hbm %s5, %s349
          %s352 = sshll.u32 %s343, 4
          %s353 = int_to_ptr.vmem [resolvable:$true] %s352
          %s354 = sshll.u32 %s350, 4
          %s355 = int_to_ptr.hbm [resolvable:$true] %s354
          %357 = dma.vmem_to_hbm [thread:$0]  %s353, 32, %s355, %s340
        $region48: #{tpu_custom_call.1} parent=39 // pred_fallthru
          _
      $region40: #{tpu_custom_call.1} parent=5 // pred_fallthru
        _
      %p358 = scmp.le.s32.totalorder 2, %s19
      // Predicated region
      $region49: #{tpu_custom_call.1} parent=5 // pred_check
        %p359 = pneg %p358
      $region50: #{tpu_custom_call.1} parent=5 // pred_check_branch
        %361 = sbr.rel (%p359) target = $region52
      $region51: #{tpu_custom_call.1} parent=5 // pred_region
        %s362 = ssub.s32 %s19, 2
        // Predicated region
        $region53: #{tpu_custom_call.1} parent=51 // pred_check
          %p363 = pneg %p158
        $region54: #{tpu_custom_call.1} parent=51 // pred_check_branch
          %365 = sbr.rel (%p363) target = $region56
        $region55: #{tpu_custom_call.1} parent=51 // pred_region
          %s366 = sand.u32 %s143, 1
          %s367 = scalar_lea.sflag [#allocation5], %s366
          %s368 = sand.u32 %s143, 1
          %s369 = smul.addr %s368, 2
          %s370 = scalar_lea.vmem [#allocation6], %s369
          %372 = dma.done %s367, 32
        $region56: #{tpu_custom_call.1} parent=51 // pred_fallthru
          _
      $region52: #{tpu_custom_call.1} parent=5 // pred_fallthru
        _
    $region6: #{tpu_custom_call.1} parent=1 // loop_footer
      %s23 = sadd.s32 1, %s19
    $region7: #{tpu_custom_call.1} parent=1 // loop_footer_branch
      %18 = sbr.rel target = $region3
    $region8: #{tpu_custom_call.1} parent=1 // loop_exit
      _
    %373 = vsyncpa [#allocation4], 1
    %s374 = scalar_lea.sflag [#allocation4], 1
    %375 = vsyncpa %s374, 1
    %376 = vsyncpa [#allocation5], 1
    %s377 = scalar_lea.sflag [#allocation5], 1
    %378 = vsyncpa %s377, 1

</llo_original>
